<compile_context>
chip_gen: v5e
topology: v5e:2x2
jax: 0.10.0
libtpu: 0.0.40
codegen_flags: <defaults>
</compile_context>

<pallas_src>
import functools

import jax
import jax.numpy as jnp
from jax import lax
from jax.experimental import pallas as pl
from jax.experimental.pallas import tpu as pltpu


def _self_attention_kernel(gamma_ref, w_ref, b_ref, x_ref, o_ref, *,
                           batch_block, cq_pad, channels, length):
    # gamma_ref: SMEM f32[1]
    # w_ref: VMEM f32[M, C]  packed [Wq/sqrt(C); 0; Wk; 0; Wv],  M = 2*cq_pad + C
    # b_ref: VMEM f32[M, 1]  packed biases (q bias pre-scaled)
    # x_ref / o_ref: VMEM f32[batch_block, C, L]   (L lane-dense, multiple of 128)
    gamma = gamma_ref[0]
    w = w_ref[...]                                            # (M, C)
    b = b_ref[...]                                            # (M, 1)
    ones_row = jnp.ones((1, length), jnp.float32)             # hoisted (row-sum probe)

    for bi in range(batch_block):                             # static unroll, bb small
        x = x_ref[bi]                                         # (C, L) f32

        # --- three 1x1 convs as ONE fused MXU matmul; bias add on the VPU.
        qkv = jnp.dot(w, x, preferred_element_type=jnp.float32) + b      # (M, L)
        q = qkv[0:cq_pad]                                     # (8, L) zero-padded rows
        k = qkv[cq_pad:2 * cq_pad]                            # (8, L) zero-padded rows
        v = qkv[2 * cq_pad:2 * cq_pad + channels]             # (C, L)

        # --- scores[i, j] = sum_c q[c, i] * k[c, j]; 1/sqrt(C) already folded into Wq,
        #     zero pad rows of q/k contribute nothing.
        scores = lax.dot_general(q, k, (((0,), (0,)), ((), ())),
                                 preferred_element_type=jnp.float32)     # (L, L)

        # --- softmax with deferred normalization: row max (XLU), exp (EUP).
        m = jnp.max(scores, axis=-1, keepdims=True)            # (L, 1)
        e = jnp.exp(scores - m)                                 # (L, L), in (0, 1]

        # out_un[c, i] = sum_j v[c, j] * e[i, j]   (== value @ E^T on the MXU)
        out_un = lax.dot_general(v, e, (((1,), (1,)), ((), ())),
                                 preferred_element_type=jnp.float32)     # (C, L)

        # Row sums directly in lane-major (1, L) layout via a ones-row matmul
        # (avoids any sublane->lane relayout), then EUP approx reciprocal and an
        # 8K-element broadcast multiply instead of a 64K-element divide.
        denom_t = lax.dot_general(ones_row, e, (((1,), (1,)), ((), ())),
                                  preferred_element_type=jnp.float32)    # (1, L)
        inv = pl.reciprocal(denom_t, approx=True)                         # (1, L)
        out = out_un * inv                                                # (C, L)

        o_ref[bi] = (gamma * out + x).astype(o_ref.dtype)


def _pick_batch_block(n, l, workspace_budget_bytes=6 * 1024 * 1024):
    """Largest divisor of n that keeps >=2 grid steps (v7x megacore) and keeps the
    per-step (L, L) softmax workspace under a small VMEM budget."""
    max_bb = max(1, workspace_budget_bytes // (2 * l * l * 4))
    best = 1
    for bb in range(1, n + 1):
        if n % bb:
            continue
        if bb > max_bb:
            break
        if n >= 2 and n // bb < 2:
            break
        best = bb
    return best


def self_attention(x, wq, bq, wk, bk, wv, bv, gamma):
    """SAGAN self-attention forward.

    x:  (N, C, H, W) f32
    wq, wk: (C//8, C) f32   bq, bk: (C//8,) f32   (1x1 conv weights/biases)
    wv: (C, C) f32          bv: (C,) f32
    gamma: (1,) f32
    """
    N, C, H, W = x.shape
    L = H * W
    Cq = wq.shape[0]
    CQP = max(8, ((Cq + 7) // 8) * 8)            # pad q/k rows to full sublane groups
    M = 2 * CQP + C
    f32 = jnp.float32
    inv_sqrt_c = 1.0 / float(C) ** 0.5

    # Pack the three 1x1-conv weights/biases; fold the 1/sqrt(C) scale into Wq / bq.
    w_pack = jnp.zeros((M, C), f32)
    w_pack = w_pack.at[0:Cq].set(wq.astype(f32) * inv_sqrt_c)
    w_pack = w_pack.at[CQP:CQP + Cq].set(wk.astype(f32))
    w_pack = w_pack.at[2 * CQP:2 * CQP + C].set(wv.astype(f32))
    b_pack = jnp.zeros((M, 1), f32)
    b_pack = b_pack.at[0:Cq, 0].set(bq.astype(f32) * inv_sqrt_c)
    b_pack = b_pack.at[CQP:CQP + Cq, 0].set(bk.astype(f32))
    b_pack = b_pack.at[2 * CQP:2 * CQP + C, 0].set(bv.astype(f32))

    x_flat = x.reshape(N, C, L).astype(f32)       # lane-dense last axis (L = H*W)

    bb = _pick_batch_block(N, L)
    grid = (N // bb,)

    kernel = functools.partial(_self_attention_kernel,
                               batch_block=bb, cq_pad=CQP, channels=C, length=L)

    flops = N * (2 * M * C * L              # fused qkv projection
                 + 2 * CQP * L * L          # q^T k
                 + 2 * C * L * L            # v @ e^T
                 + 2 * L * L                # ones @ e row sums
                 + 4 * C * L)               # bias / scale / residual elementwise
    transcendentals = N * (L * L + L)       # exp + reciprocal
    bytes_accessed = 4 * (2 * N * C * L + M * C + M) + 4

    out = pl.pallas_call(
        kernel,
        out_shape=jax.ShapeDtypeStruct((N, C, L), f32),
        grid=grid,
        in_specs=[
            pl.BlockSpec(memory_space=pltpu.MemorySpace.SMEM),   # gamma scalar
            pl.BlockSpec((M, C), lambda n: (0, 0)),              # packed weights
            pl.BlockSpec((M, 1), lambda n: (0, 0)),              # packed biases
            pl.BlockSpec((bb, C, L), lambda n: (n, 0, 0)),       # x block
        ],
        out_specs=pl.BlockSpec((bb, C, L), lambda n: (n, 0, 0)),
        compiler_params=pltpu.CompilerParams(
            dimension_semantics=("parallel",),
            vmem_limit_bytes=int(min(100 * 2**20,
                                     max(32 * 2**20, 8 * bb * L * L * 4)))),
        cost_estimate=pl.CostEstimate(flops=int(flops),
                                      transcendentals=int(transcendentals),
                                      bytes_accessed=int(bytes_accessed)),
    )(gamma, w_pack, b_pack, x_flat)

    return out.reshape(N, C, H, W)


def _reference(x, wq, bq, wk, bk, wv, bv, gamma):
    """Pure-JAX reference matching the PyTorch SelfAttention.forward."""
    N, C, H, W = x.shape
    L = H * W
    hp = jax.lax.Precision.HIGHEST
    xf = x.reshape(N, C, L)
    q = jnp.einsum("oc,ncl->nol", wq, xf, precision=hp) + bq[None, :, None]
    k = jnp.einsum("oc,ncl->nol", wk, xf, precision=hp) + bk[None, :, None]
    v = jnp.einsum("oc,ncl->nol", wv, xf, precision=hp) + bv[None, :, None]
    scores = jnp.einsum("nci,ncj->nij", q, k, precision=hp) / (C ** 0.5)
    attn = jax.nn.softmax(scores, axis=-1)
    out = jnp.einsum("ncj,nij->nci", v, attn, precision=hp)
    return (gamma[0] * out + xf).reshape(N, C, H, W)


if __name__ == "__main__":
    key = jax.random.PRNGKey(0)
    ks = jax.random.split(key, 8)

    N, C, H, W = 2, 32, 16, 16          # in_channels=32 -> C//8 = 4
    Cq = C // 8

    x = jax.random.normal(ks[0], (N, C, H, W), dtype=jnp.float32)
    wq = jax.random.normal(ks[1], (Cq, C), dtype=jnp.float32) / (C ** 0.5)
    bq = jax.random.normal(ks[2], (Cq,), dtype=jnp.float32) * 0.1
    wk = jax.random.normal(ks[3], (Cq, C), dtype=jnp.float32) / (C ** 0.5)
    bk = jax.random.normal(ks[4], (Cq,), dtype=jnp.float32) * 0.1
    wv = jax.random.normal(ks[5], (C, C), dtype=jnp.float32) / (C ** 0.5)
    bv = jax.random.normal(ks[6], (C,), dtype=jnp.float32) * 0.1
    # PyTorch initializes gamma to 0 (output == x); use a nonzero value so the
    # attention path is actually exercised by the check.
    gamma = jnp.array([0.5], dtype=jnp.float32)

    out = jax.block_until_ready(self_attention(x, wq, bq, wk, bk, wv, bv, gamma))
    ref = _reference(x, wq, bq, wk, bk, wv, bv, gamma)

    assert out.shape == (N, C, H, W), out.shape
    assert jnp.allclose(out, ref, atol=2e-3, rtol=2e-3), \
        f"mismatch vs reference: max abs diff {jnp.max(jnp.abs(out - ref))}"
    print("KERNEL_OK")
</pallas_src>

<mosaic_0001>
module attributes {stable_mosaic.version = 11 : i64} {
  func.func @_self_attention_kernel(%arg0: i32, %arg1: memref<1xf32, #tpu.memory_space<smem>>, %arg2: memref<48x32xf32, #tpu.memory_space<vmem>>, %arg3: memref<48x1xf32, #tpu.memory_space<vmem>>, %arg4: memref<1x32x256xf32, #tpu.memory_space<vmem>>, %arg5: memref<1x32x256xf32, #tpu.memory_space<vmem>>) attributes {dimension_semantics = [#tpu.dimension_semantics<parallel>], iteration_bounds = array<i64: 2>, scalar_prefetch = 0 : i64, scratch_operands = 0 : i64, tpu.core_type = #tpu.core_type<tc>, window_params = [{transform_indices = @transform_0, window_bounds = array<i64: 1>}, {pipeline_mode = #tpu.pipeline_mode<synchronous>, transform_indices = @transform_1, window_bounds = array<i64: 48, 32>}, {pipeline_mode = #tpu.pipeline_mode<synchronous>, transform_indices = @transform_2, window_bounds = array<i64: 48, 1>}, {transform_indices = @transform_3, window_bounds = array<i64: 1, 32, 256>}, {transform_indices = @transform_4, window_bounds = array<i64: 1, 32, 256>}]} {
    %c0 = arith.constant 0 : index
    %0 = memref.load %arg1[%c0] : memref<1xf32, #tpu.memory_space<smem>>
    %c0_0 = arith.constant 0 : index
    %c0_1 = arith.constant 0 : index
    %1 = vector.load %arg2[%c0_0, %c0_1] : memref<48x32xf32, #tpu.memory_space<vmem>>, vector<48x32xf32>
    %c0_2 = arith.constant 0 : index
    %c0_3 = arith.constant 0 : index
    %2 = vector.load %arg3[%c0_2, %c0_3] : memref<48x1xf32, #tpu.memory_space<vmem>>, vector<48x1xf32>
    %cst = arith.constant 1.000000e+00 : f32
    %3 = vector.broadcast %cst : f32 to vector<1x256xf32>
    %c0_4 = arith.constant 0 : index
    %c0_5 = arith.constant 0 : index
    %c0_6 = arith.constant 0 : index
    %4 = vector.load %arg4[%c0_4, %c0_5, %c0_6] : memref<1x32x256xf32, #tpu.memory_space<vmem>>, vector<1x32x256xf32>
    %5 = vector.shape_cast %4 : vector<1x32x256xf32> to vector<32x256xf32>
    %cst_7 = arith.constant dense<0.000000e+00> : vector<48x256xf32>
    %6 = tpu.matmul %1, %5, %cst_7 {dimension_numbers = #tpu.dot_dimension_numbers<[1], [0], [0], [1], [0, 0, 1, 1], [], []>} : vector<48x32xf32>, vector<32x256xf32>, vector<48x256xf32> -> vector<48x256xf32>
    %7 = vector.broadcast %2 : vector<48x1xf32> to vector<48x256xf32>
    %8 = arith.addf %6, %7 : vector<48x256xf32>
    %9 = vector.extract_strided_slice %8 {offsets = [0, 0], sizes = [8, 256], strides = [1, 1]} : vector<48x256xf32> to vector<8x256xf32>
    %10 = vector.extract_strided_slice %8 {offsets = [8, 0], sizes = [8, 256], strides = [1, 1]} : vector<48x256xf32> to vector<8x256xf32>
    %11 = vector.extract_strided_slice %8 {offsets = [16, 0], sizes = [32, 256], strides = [1, 1]} : vector<48x256xf32> to vector<32x256xf32>
    %cst_8 = arith.constant dense<0.000000e+00> : vector<256x256xf32>
    %12 = tpu.matmul %9, %10, %cst_8 {dimension_numbers = #tpu.dot_dimension_numbers<[0], [0], [1], [1], [0, 1, 1, 1], [], []>} : vector<8x256xf32>, vector<8x256xf32>, vector<256x256xf32> -> vector<256x256xf32>
    %cst_9 = arith.constant dense<0xFF800000> : vector<256xf32>
    %13 = vector.multi_reduction <maximumf>, %12, %cst_9 [1] : vector<256x256xf32> to vector<256xf32>
    %14 = vector.shape_cast %13 : vector<256xf32> to vector<256x1xf32>
    %15 = vector.broadcast %14 : vector<256x1xf32> to vector<256x256xf32>
    %16 = arith.subf %12, %15 : vector<256x256xf32>
    %17 = math.exp %16 : vector<256x256xf32>
    %cst_10 = arith.constant dense<0.000000e+00> : vector<32x256xf32>
    %18 = tpu.matmul %11, %17, %cst_10 {dimension_numbers = #tpu.dot_dimension_numbers<[1], [1], [0], [0], [0, 0, 1, 0], [], []>} : vector<32x256xf32>, vector<256x256xf32>, vector<32x256xf32> -> vector<32x256xf32>
    %cst_11 = arith.constant dense<0.000000e+00> : vector<1x256xf32>
    %19 = tpu.matmul %3, %17, %cst_11 {dimension_numbers = #tpu.dot_dimension_numbers<[1], [1], [0], [0], [0, 0, 1, 0], [], []>} : vector<1x256xf32>, vector<256x256xf32>, vector<1x256xf32> -> vector<1x256xf32>
    %20 = tpu.reciprocal %19 {approx = true} : vector<1x256xf32> -> vector<1x256xf32>
    %21 = vector.broadcast %20 : vector<1x256xf32> to vector<32x256xf32>
    %22 = arith.mulf %18, %21 : vector<32x256xf32>
    %23 = vector.broadcast %0 : f32 to vector<32x256xf32>
    %24 = arith.mulf %23, %22 : vector<32x256xf32>
    %25 = arith.addf %24, %5 : vector<32x256xf32>
    %c0_12 = arith.constant 0 : index
    %c0_13 = arith.constant 0 : index
    %c0_14 = arith.constant 0 : index
    %26 = vector.load %arg5[%c0_12, %c0_13, %c0_14] : memref<1x32x256xf32, #tpu.memory_space<vmem>>, vector<1x32x256xf32>
    %27 = vector.shape_cast %26 : vector<1x32x256xf32> to vector<32x256xf32>
    %28 = vector.shape_cast %25 : vector<32x256xf32> to vector<1x32x256xf32>
    tpu.vector_store %arg5[%c0_12, %c0_13, %c0_14], %28 {strides = array<i32>} : memref<1x32x256xf32, #tpu.memory_space<vmem>>, vector<1x32x256xf32>,
    return
  }
  func.func @transform_0(%arg0: i32) -> i32 {
    %c0_i32 = arith.constant 0 : i32
    %c0_i32_0 = arith.constant 0 : i32
    return %c0_i32 : i32
  }
  func.func @transform_1(%arg0: i32) -> (i32, i32) {
    %c0_i32 = arith.constant 0 : i32
    %c0_i32_0 = arith.constant 0 : i32
    %c0_i32_1 = arith.constant 0 : i32
    return %c0_i32, %c0_i32_0 : i32, i32
  }
  func.func @transform_2(%arg0: i32) -> (i32, i32) {
    %c0_i32 = arith.constant 0 : i32
    %c0_i32_0 = arith.constant 0 : i32
    %c0_i32_1 = arith.constant 0 : i32
    return %c0_i32, %c0_i32_0 : i32, i32
  }
  func.func @transform_3(%arg0: i32) -> (i32, i32, i32) {
    %c0_i32 = arith.constant 0 : i32
    %c0_i32_0 = arith.constant 0 : i32
    %c0_i32_1 = arith.constant 0 : i32
    return %arg0, %c0_i32, %c0_i32_0 : i32, i32, i32
  }
  func.func @transform_4(%arg0: i32) -> (i32, i32, i32) {
    %c0_i32 = arith.constant 0 : i32
    %c0_i32_0 = arith.constant 0 : i32
    %c0_i32_1 = arith.constant 0 : i32
    return %arg0, %c0_i32, %c0_i32_0 : i32, i32, i32
  }
}

</mosaic_0001>

<llo_original>
// kernel: tpu_custom_call.1
$region0: #{tpu_custom_call.1}
  #allocation0 [shape = 'u32[]', space=smem, size = 0x4, offset = 0x4, fixed_abs, tag = 'smem constant byte address 0x4 - core index']
  #allocation1 [shape = 'u32[72,128]{1,0:T(1,128)}', space=vmem, size = 0x9000, scoped, tag = 'internal scratch']
  #allocation2 [shape = 'f32[1]{0:T(128)S(6)}', space=smem, size = 0x200, scoped, tag = 'scoped memory for tpu_custom_call.1']
  %s0 = inlined_call_operand.<no memory space> [shape: f32[1], index: 0, kind: input, shape index: {}]
  %s1 = inlined_call_operand.vmem [shape: f32[48,32], index: 1, kind: input, shape index: {}]
  %s2 = inlined_call_operand.vmem [shape: f32[48,1], index: 2, kind: input, shape index: {}]
  %s3 = inlined_call_operand.vmem [shape: f32[2,32,256], index: 3, kind: input, shape index: {}]
  %s4 = inlined_call_operand.hbm [shape: f32[2,32,256], index: 4, kind: output, shape index: {}]
  %s5 = sld [smem:[#allocation0]]
  $region49: #{tpu_custom_call.1} parent=0
    _
  %s7 = ssub.s32 1, %s5
  %s8 = scalar_select 0, %s7, %s5
  %9 = sst [smem:[#allocation2]] %s0
  $region1: #{tpu_custom_call.1} parent=0
    #allocation3 [shape = 'u8[65536]{0}', space=vmem, size = 0x10000, scoped, tag = 'output window, operand 0']
    #allocation4 [shape = 's32[2]{0}', space=sflag, size = 0x8, scoped, tag = 'scoped memory for tpu_custom_call.1']
    %10 = vsyncpa [#allocation4], 0
    %s11 = scalar_lea.sflag [#allocation4], 1
    %12 = vsyncpa %s11, 0
    loop: start=0, step=1, limit=4
    $region2: #{tpu_custom_call.1} parent=1 // loop_pre_header
      _
    $region3: #{tpu_custom_call.1} parent=1 // loop_header
      %s14 = sphi 0, %s18
      %p15 = scmp.ge.s32.totalorder %s14, 4
      %s22 = sphi 0, %s22
      %s24 = sphi 0, %s22
      %s25 = sphi 0, %s24
      %s39 = sphi 0, %s25
      %s43 = sphi 0, %s43
      %s45 = sphi 0, %s43
      %s46 = sphi 0, %s45
      %s60 = sphi 0, %s46
      %s64 = sphi 0, %s64
      %s66 = sphi 0, %s64
      %s67 = sphi 0, %s66
      %s81 = sphi 0, %s67
      %s87 = sphi 0, %s89
      %s90 = sphi 0, %s87
      %s91 = sphi 0, %s90
      %s107 = sphi 0, %s91
      %s113 = sphi 0, %s115
      %s116 = sphi 0, %s113
      %s117 = sphi 0, %s116
      %s133 = sphi 0, %s117
    $region4: #{tpu_custom_call.1} parent=1 // loop_header_branch
      %17 = sbr.rel (%p15) target = $region8
    $region5: #{tpu_custom_call.1} parent=1 // loop_body
      %s19 = ssub.s32 %s14, 1
      %s20 = ssub.s32 %s14, 2
      %s21 = sadd.s32 %s14, 1
      %s23 = sadd.s32 %s22, 1
      %p26 = scmp.eq.s32.totalorder %s14, 1
      %p27 = scmp.ne.s32.totalorder %s22, %s24
      %p28 = scmp.eq.s32.totalorder %s14, 0
      %p29 = por %p27, %p28
      %p30 = scmp.ne.s32.totalorder %s22, %s24
      %p31 = scmp.eq.s32.totalorder %s19, 1
      %p32 = por %p30, %p31
      %p33 = scmp.ne.s32.totalorder %s24, %s25
      %p34 = scmp.eq.s32.totalorder %s19, 0
      %p35 = por %p33, %p34
      %p36 = scmp.ne.s32.totalorder %s24, %s25
      %p37 = scmp.eq.s32.totalorder %s20, 1
      %p38 = por %p36, %p37
      %p40 = scmp.ne.s32.totalorder %s25, %s39
      %p41 = scmp.eq.s32.totalorder %s20, 0
      %p42 = por %p40, %p41
      %s44 = sadd.s32 %s43, 1
      %p47 = scmp.eq.s32.totalorder %s14, 1
      %p48 = scmp.ne.s32.totalorder %s43, %s45
      %p49 = scmp.eq.s32.totalorder %s14, 0
      %p50 = por %p48, %p49
      %p51 = scmp.ne.s32.totalorder %s43, %s45
      %p52 = scmp.eq.s32.totalorder %s19, 1
      %p53 = por %p51, %p52
      %p54 = scmp.ne.s32.totalorder %s45, %s46
      %p55 = scmp.eq.s32.totalorder %s19, 0
      %p56 = por %p54, %p55
      %p57 = scmp.ne.s32.totalorder %s45, %s46
      %p58 = scmp.eq.s32.totalorder %s20, 1
      %p59 = por %p57, %p58
      %p61 = scmp.ne.s32.totalorder %s46, %s60
      %p62 = scmp.eq.s32.totalorder %s20, 0
      %p63 = por %p61, %p62
      %s65 = sadd.s32 %s64, 1
      %p68 = scmp.eq.s32.totalorder %s14, 1
      %p69 = scmp.ne.s32.totalorder %s64, %s66
      %p70 = scmp.eq.s32.totalorder %s14, 0
      %p71 = por %p69, %p70
      %p72 = scmp.ne.s32.totalorder %s64, %s66
      %p73 = scmp.eq.s32.totalorder %s19, 1
      %p74 = por %p72, %p73
      %p75 = scmp.ne.s32.totalorder %s66, %s67
      %p76 = scmp.eq.s32.totalorder %s19, 0
      %p77 = por %p75, %p76
      %p78 = scmp.ne.s32.totalorder %s66, %s67
      %p79 = scmp.eq.s32.totalorder %s20, 1
      %p80 = por %p78, %p79
      %p82 = scmp.ne.s32.totalorder %s67, %s81
      %p83 = scmp.eq.s32.totalorder %s20, 0
      %p84 = por %p82, %p83
      %s85 = ssub.s32 %s14, %s21
      %p86 = scmp.eq.s32.totalorder %s85, 0
      %s88 = sadd.s32 %s87, 1
      %s89 = scalar_select %p86, %s87, %s88
      %p92 = pneg %p86
      %p93 = scmp.eq.s32.totalorder %s14, 1
      %p94 = por %p92, %p93
      %p95 = scmp.ne.s32.totalorder %s87, %s90
      %p96 = scmp.eq.s32.totalorder %s14, 0
      %p97 = por %p95, %p96
      %p98 = scmp.ne.s32.totalorder %s87, %s90
      %p99 = scmp.eq.s32.totalorder %s19, 1
      %p100 = por %p98, %p99
      %p101 = scmp.ne.s32.totalorder %s90, %s91
      %p102 = scmp.eq.s32.totalorder %s19, 0
      %p103 = por %p101, %p102
      %p104 = scmp.ne.s32.totalorder %s90, %s91
      %p105 = scmp.eq.s32.totalorder %s20, 1
      %p106 = por %p104, %p105
      %p108 = scmp.ne.s32.totalorder %s91, %s107
      %p109 = scmp.eq.s32.totalorder %s20, 0
      %p110 = por %p108, %p109
      %s111 = ssub.s32 %s14, %s21
      %p112 = scmp.eq.s32.totalorder %s111, 0
      %s114 = sadd.s32 %s113, 1
      %s115 = scalar_select %p112, %s113, %s114
      %p118 = pneg %p112
      %p119 = scmp.eq.s32.totalorder %s14, 1
      %p120 = por %p118, %p119
      %p121 = scmp.ne.s32.totalorder %s113, %s116
      %p122 = scmp.eq.s32.totalorder %s14, 0
      %p123 = por %p121, %p122
      %p124 = scmp.ne.s32.totalorder %s113, %s116
      %p125 = scmp.eq.s32.totalorder %s19, 1
      %p126 = por %p124, %p125
      %p127 = scmp.ne.s32.totalorder %s116, %s117
      %p128 = scmp.eq.s32.totalorder %s19, 0
      %p129 = por %p127, %p128
      %p130 = scmp.ne.s32.totalorder %s116, %s117
      %p131 = scmp.eq.s32.totalorder %s20, 1
      %p132 = por %p130, %p131
      %p134 = scmp.ne.s32.totalorder %s117, %s133
      %p135 = scmp.eq.s32.totalorder %s20, 0
      %p136 = por %p134, %p135
      %p137 = scmp.le.s32.totalorder 1, %s14
      %p138 = scmp.lt.s32.totalorder %s14, 3
      %p139 = pnand %p137, %p138
      %p140 = pneg %p139
      // Predicated region
      $region9: #{tpu_custom_call.1} parent=5 // pred_check
        _
      $region10: #{tpu_custom_call.1} parent=5 // pred_check_branch
        %142 = sbr.rel (%p139) target = $region12
      $region11: #{tpu_custom_call.1} parent=5 // pred_region
        %s143 = ssub.s32 %s14, 1
        // Predicated region
        $region13: #{tpu_custom_call.1} parent=11 // pred_check
          %p144 = pneg %p35
        $region14: #{tpu_custom_call.1} parent=11 // pred_check_branch
          %146 = sbr.rel (%p144) target = $region16
        $region15: #{tpu_custom_call.1} parent=11 // pred_region
          _
        $region16: #{tpu_custom_call.1} parent=11 // pred_fallthru
          _
        // Predicated region
        $region17: #{tpu_custom_call.1} parent=11 // pred_check
          %p147 = pneg %p56
        $region18: #{tpu_custom_call.1} parent=11 // pred_check_branch
          %149 = sbr.rel (%p147) target = $region20
        $region19: #{tpu_custom_call.1} parent=11 // pred_region
          _
        $region20: #{tpu_custom_call.1} parent=11 // pred_fallthru
          _
        // Predicated region
        $region21: #{tpu_custom_call.1} parent=11 // pred_check
          %p150 = pneg %p77
        $region22: #{tpu_custom_call.1} parent=11 // pred_check_branch
          %152 = sbr.rel (%p150) target = $region24
        $region23: #{tpu_custom_call.1} parent=11 // pred_region
          _
        $region24: #{tpu_custom_call.1} parent=11 // pred_fallthru
          _
      $region12: #{tpu_custom_call.1} parent=5 // pred_fallthru
        _
      %p153 = scmp.lt.s32.totalorder %s14, 2
      // Predicated region
      $region25: #{tpu_custom_call.1} parent=5 // pred_check
        %p154 = pneg %p153
      $region26: #{tpu_custom_call.1} parent=5 // pred_check_branch
        %156 = sbr.rel (%p154) target = $region28
      $region27: #{tpu_custom_call.1} parent=5 // pred_region
        // Predicated region
        $region29: #{tpu_custom_call.1} parent=27 // pred_check
          %p157 = pneg %p97
        $region30: #{tpu_custom_call.1} parent=27 // pred_check_branch
          %159 = sbr.rel (%p157) target = $region32
        $region31: #{tpu_custom_call.1} parent=27 // pred_region
          %p160 = scmp.lt.s32.totalorder %s14, 1
          %s161 = scalar_select %p160, %s14, 1
          %s162 = smul.addr %s161, 8
          %s163 = smul.addr %s162, 8
          %s164 = scalar_lea.vmem %s3, %s163
        $region32: #{tpu_custom_call.1} parent=27 // pred_fallthru
          _
      $region28: #{tpu_custom_call.1} parent=5 // pred_fallthru
        _
      %p165 = scmp.le.s32.totalorder 1, %s14
      %p166 = scmp.lt.s32.totalorder %s14, 3
      %p167 = pnand %p165, %p166
      %p168 = pneg %p167
      // Predicated region
      $region33: #{tpu_custom_call.1} parent=5 // pred_check
        _
      $region34: #{tpu_custom_call.1} parent=5 // pred_check_branch
        %170 = sbr.rel (%p167) target = $region36
      $region35: #{tpu_custom_call.1} parent=5 // pred_region
        %s171 = ssub.s32 %s14, 1
        %p172 = pneg %p35
        %p173 = pneg %p32
        %p174 = pneg %p56
        %p175 = pneg %p53
        %p176 = pneg %p77
        %p177 = pneg %p74
        %p178 = scmp.lt.s32.totalorder %s19, 1
        %s179 = scalar_select %p178, %s19, 1
        %s180 = smul.addr %s179, 8
        %s181 = smul.addr %s180, 8
        %s182 = scalar_lea.vmem %s3, %s181
        %p183 = pneg %p103
        %p184 = pneg %p100
        %p185 = pneg %p129
        %p186 = pneg %p126
        %s187 = sand.u32 %s116, 1
        %s188 = scalar_lea.sflag [#allocation4], %s187
        %s189 = sand.u32 %s116, 1
        %s190 = smul.addr %s189, 64
        %s191 = scalar_lea.vmem [#allocation3], %s190
        %p192 = scmp.lt.s32.totalorder %s19, 1
        %s193 = scalar_select %p192, %s19, 1
        %s194 = smul.addr %s193, 8
        %s195 = smul.addr %s194, 8
        %s196 = scalar_lea.vmem %s3, %s195
        %s197 = sld [smem:[#allocation2]]
        %v198 = vld [vmem:[%s1] sm:$0xff]
        %v199 = vld [vmem:[%s1 + $0x8] sm:$0xff]
        %v200 = vld [vmem:[%s1 + $0x10] sm:$0xff]
        %v201 = vld [vmem:[%s1 + $0x18] sm:$0xff]
        %v202 = vld [vmem:[%s1 + $0x20] sm:$0xff]
        %v203 = vld [vmem:[%s1 + $0x28] sm:$0xff]
        %v204 = vld [vmem:[%s2] sm:$0xff]
        %v205 = vld [vmem:[%s2 + $0x8] sm:$0xff]
        %v206 = vld [vmem:[%s2 + $0x10] sm:$0xff]
        %v207 = vld [vmem:[%s2 + $0x18] sm:$0xff]
        %v208 = vld [vmem:[%s2 + $0x20] sm:$0xff]
        %v209 = vld [vmem:[%s2 + $0x28] sm:$0xff]
        %v210 = vld [vmem:[%s196] sm:$0xff]
        %v211 = vld [vmem:[%s196 + $0x8] sm:$0xff]
        %v212 = vld [vmem:[%s196 + $0x10] sm:$0xff]
        %v213 = vld [vmem:[%s196 + $0x18] sm:$0xff]
        %v214 = vld [vmem:[%s196 + $0x20] sm:$0xff]
        %v215 = vld [vmem:[%s196 + $0x28] sm:$0xff]
        %v216 = vld [vmem:[%s196 + $0x30] sm:$0xff]
        %v217 = vld [vmem:[%s196 + $0x38] sm:$0xff]
        %219 = vset.pattern.permute.xlu0 0
        %220 = vperm.xlu0 %219, %v204
        %v221 = vpop.permute.xlu0 %220
        %224 = vset.pattern.permute.xlu0 0
        %225 = vperm.xlu0 %224, %v205
        %v226 = vpop.permute.xlu0 %225
        %229 = vset.pattern.permute.xlu0 0
        %230 = vperm.xlu0 %229, %v206
        %v231 = vpop.permute.xlu0 %230
        %234 = vset.pattern.permute.xlu0 0
        %235 = vperm.xlu0 %234, %v207
        %v236 = vpop.permute.xlu0 %235
        %239 = vset.pattern.permute.xlu0 0
        %240 = vperm.xlu0 %239, %v208
        %v241 = vpop.permute.xlu0 %240
        %244 = vset.pattern.permute.xlu0 0
        %245 = vperm.xlu0 %244, %v209
        %v246 = vpop.permute.xlu0 %245
        %vm248 = vcmask 261120
        %v250 = vsel %vm248, %v198, 0
        %v253 = vsel %vm248, %v199, 0
        %v256 = vsel %vm248, %v200, 0
        %v259 = vsel %vm248, %v201, 0
        %v262 = vsel %vm248, %v202, 0
        %v265 = vsel %vm248, %v203, 0
        %267 = vmatpush.msra.mxu0 0.0
        %268 = vmatpush.msra.mxu0 0.0
        %269 = vmatpush.msra.mxu0 0.0
        %270 = vmatpush.msra.mxu0 0.0
        %271 = vmatpush.msra.mxu0 0.0
        %272 = vmatpush.msra.mxu0 0.0
        %273 = vmatpush.msra.mxu0 0.0
        %274 = vmatpush.msra.mxu0 0.0
        %275 = vmatpush.msra.mxu0 0.0
        %276 = vmatpush.msra.mxu0 0.0
        %277 = vmatpush.msra.mxu0 0.0
        %278 = vmatpush.msra.mxu0 0.0
        %279 = vmatpush.msra.mxu0 %v216
        %280 = vmatpush.msra.mxu0 %v214
        %281 = vmatpush.msra.mxu0 %v212
        %282 = vmatpush.msra.mxu0 %v210
        %283 = vmatmul.f32.gmra.mxu0 %v250
        %v284 = vpop.f32.mrf.mxu0
        %v285 = vadd.f32 %v221, %v284
        %286 = vmatmul.f32.gmra.mxu0 %v253
        %v287 = vpop.f32.mrf.mxu0
        %v288 = vadd.f32 %v226, %v287
        %289 = vmatmul.f32.gmra.mxu0 %v256
        %v290 = vpop.f32.mrf.mxu0
        %v291 = vadd.f32 %v231, %v290
        %292 = vmatmul.f32.gmra.mxu0 %v259
        %v293 = vpop.f32.mrf.mxu0
        %v294 = vadd.f32 %v236, %v293
        %295 = vmatmul.f32.gmra.mxu0 %v262
        %v296 = vpop.f32.mrf.mxu0
        %v297 = vadd.f32 %v241, %v296
        %298 = vmatmul.f32.gmra.mxu0 %v265
        %v299 = vpop.f32.mrf.mxu0
        %v300 = vadd.f32 %v246, %v299
        %301 = vdwg.mxu0
        %302 = vmatpush.msra.mxu0 0.0
        %303 = vmatpush.msra.mxu0 0.0
        %304 = vmatpush.msra.mxu0 0.0
        %305 = vmatpush.msra.mxu0 0.0
        %306 = vmatpush.msra.mxu0 0.0
        %307 = vmatpush.msra.mxu0 0.0
        %308 = vmatpush.msra.mxu0 0.0
        %309 = vmatpush.msra.mxu0 0.0
        %310 = vmatpush.msra.mxu0 0.0
        %311 = vmatpush.msra.mxu0 0.0
        %312 = vmatpush.msra.mxu0 0.0
        %313 = vmatpush.msra.mxu0 0.0
        %314 = vmatpush.msra.mxu0 %v217
        %315 = vmatpush.msra.mxu0 %v215
        %316 = vmatpush.msra.mxu0 %v213
        %317 = vmatpush.msra.mxu0 %v211
        %318 = vmatmul.f32.gmra.mxu0 %v250
        %v319 = vpop.f32.mrf.mxu0
        %v320 = vadd.f32 %v221, %v319
        %321 = vmatmul.f32.gmra.mxu0 %v253
        %v322 = vpop.f32.mrf.mxu0
        %v323 = vadd.f32 %v226, %v322
        %324 = vmatmul.f32.gmra.mxu0 %v256
        %v325 = vpop.f32.mrf.mxu0
        %v326 = vadd.f32 %v231, %v325
        %327 = vmatmul.f32.gmra.mxu0 %v259
        %v328 = vpop.f32.mrf.mxu0
        %v329 = vadd.f32 %v236, %v328
        %330 = vmatmul.f32.gmra.mxu0 %v262
        %v331 = vpop.f32.mrf.mxu0
        %v332 = vadd.f32 %v241, %v331
        %333 = vmatmul.f32.gmra.mxu0 %v265
        %v334 = vpop.f32.mrf.mxu0
        %v335 = vadd.f32 %v246, %v334
        %336 = vdwg.mxu0
        %337 = vxpose.xlu0.b32.start [1/16] %v285, 128
        %338 = vxpose.xlu0.b32.cont [2/16] 0.0, 128
        %339 = vxpose.xlu0.b32.cont [3/16] 0.0, 128
        %340 = vxpose.xlu0.b32.cont [4/16] 0.0, 128
        %341 = vxpose.xlu0.b32.cont [5/16] 0.0, 128
        %342 = vxpose.xlu0.b32.cont [6/16] 0.0, 128
        %343 = vxpose.xlu0.b32.cont [7/16] 0.0, 128
        %344 = vxpose.xlu0.b32.cont [8/16] 0.0, 128
        %345 = vxpose.xlu0.b32.cont [9/16] 0.0, 128
        %346 = vxpose.xlu0.b32.cont [10/16] 0.0, 128
        %347 = vxpose.xlu0.b32.cont [11/16] 0.0, 128
        %348 = vxpose.xlu0.b32.cont [12/16] 0.0, 128
        %349 = vxpose.xlu0.b32.cont [13/16] 0.0, 128
        %350 = vxpose.xlu0.b32.cont [14/16] 0.0, 128
        %351 = vxpose.xlu0.b32.cont [15/16] 0.0, 128
        %352 = vxpose.xlu0.b32.end [16/16] 0.0, 128
        %v353 = vpop.trf.xlu0
        %v354 = vpop.trf.xlu0
        %v355 = vpop.trf.xlu0
        %v356 = vpop.trf.xlu0
        %v357 = vpop.trf.xlu0
        %v358 = vpop.trf.xlu0
        %v359 = vpop.trf.xlu0
        %v360 = vpop.trf.xlu0
        %v361 = vpop.trf.xlu0
        %v362 = vpop.trf.xlu0
        %v363 = vpop.trf.xlu0
        %v364 = vpop.trf.xlu0
        %v365 = vpop.trf.xlu0
        %v366 = vpop.trf.xlu0
        %v367 = vpop.trf.xlu0
        %v368 = vpop.trf.xlu0
        %369 = vxpose.xlu0.b32.start [1/16] %v320, 128
        %370 = vxpose.xlu0.b32.cont [2/16] 0.0, 128
        %371 = vxpose.xlu0.b32.cont [3/16] 0.0, 128
        %372 = vxpose.xlu0.b32.cont [4/16] 0.0, 128
        %373 = vxpose.xlu0.b32.cont [5/16] 0.0, 128
        %374 = vxpose.xlu0.b32.cont [6/16] 0.0, 128
        %375 = vxpose.xlu0.b32.cont [7/16] 0.0, 128
        %376 = vxpose.xlu0.b32.cont [8/16] 0.0, 128
        %377 = vxpose.xlu0.b32.cont [9/16] 0.0, 128
        %378 = vxpose.xlu0.b32.cont [10/16] 0.0, 128
        %379 = vxpose.xlu0.b32.cont [11/16] 0.0, 128
        %380 = vxpose.xlu0.b32.cont [12/16] 0.0, 128
        %381 = vxpose.xlu0.b32.cont [13/16] 0.0, 128
        %382 = vxpose.xlu0.b32.cont [14/16] 0.0, 128
        %383 = vxpose.xlu0.b32.cont [15/16] 0.0, 128
        %384 = vxpose.xlu0.b32.end [16/16] 0.0, 128
        %v385 = vpop.trf.xlu0
        %v386 = vpop.trf.xlu0
        %v387 = vpop.trf.xlu0
        %v388 = vpop.trf.xlu0
        %v389 = vpop.trf.xlu0
        %v390 = vpop.trf.xlu0
        %v391 = vpop.trf.xlu0
        %v392 = vpop.trf.xlu0
        %v393 = vpop.trf.xlu0
        %v394 = vpop.trf.xlu0
        %v395 = vpop.trf.xlu0
        %v396 = vpop.trf.xlu0
        %v397 = vpop.trf.xlu0
        %v398 = vpop.trf.xlu0
        %v399 = vpop.trf.xlu0
        %v400 = vpop.trf.xlu0
        %vm401 = vcmask 64512
        %v403 = vsel %vm401, %v353, 0
        %v406 = vsel %vm401, %v354, 0
        %v409 = vsel %vm401, %v355, 0
        %v412 = vsel %vm401, %v356, 0
        %v415 = vsel %vm401, %v357, 0
        %v418 = vsel %vm401, %v358, 0
        %v421 = vsel %vm401, %v359, 0
        %v424 = vsel %vm401, %v360, 0
        %v427 = vsel %vm401, %v361, 0
        %v430 = vsel %vm401, %v362, 0
        %v433 = vsel %vm401, %v363, 0
        %v436 = vsel %vm401, %v364, 0
        %v439 = vsel %vm401, %v365, 0
        %v442 = vsel %vm401, %v366, 0
        %v445 = vsel %vm401, %v367, 0
        %v448 = vsel %vm401, %v368, 0
        %v451 = vsel %vm401, %v385, 0
        %v454 = vsel %vm401, %v386, 0
        %v457 = vsel %vm401, %v387, 0
        %v460 = vsel %vm401, %v388, 0
        %v463 = vsel %vm401, %v389, 0
        %v466 = vsel %vm401, %v390, 0
        %v469 = vsel %vm401, %v391, 0
        %v472 = vsel %vm401, %v392, 0
        %v475 = vsel %vm401, %v393, 0
        %v478 = vsel %vm401, %v394, 0
        %v481 = vsel %vm401, %v395, 0
        %v484 = vsel %vm401, %v396, 0
        %v487 = vsel %vm401, %v397, 0
        %v490 = vsel %vm401, %v398, 0
        %v493 = vsel %vm401, %v399, 0
        %v496 = vsel %vm401, %v400, 0
        %498 = vmatpush.msra.mxu0 0.0
        %499 = vmatpush.msra.mxu0 0.0
        %500 = vmatpush.msra.mxu0 0.0
        %501 = vmatpush.msra.mxu0 0.0
        %502 = vmatpush.msra.mxu0 0.0
        %503 = vmatpush.msra.mxu0 0.0
        %504 = vmatpush.msra.mxu0 0.0
        %505 = vmatpush.msra.mxu0 0.0
        %506 = vmatpush.msra.mxu0 0.0
        %507 = vmatpush.msra.mxu0 0.0
        %508 = vmatpush.msra.mxu0 0.0
        %509 = vmatpush.msra.mxu0 0.0
        %510 = vmatpush.msra.mxu0 0.0
        %511 = vmatpush.msra.mxu0 0.0
        %512 = vmatpush.msra.mxu0 0.0
        %513 = vmatpush.msra.mxu0 %v288
        %514 = vmatmul.f32.gmra.mxu0 %v403
        %v515 = vpop.f32.mrf.mxu0
        %v516 = vadd.f32 0.0, %v515
        %517 = vmatmul.f32.gmra.mxu0 %v406
        %v518 = vpop.f32.mrf.mxu0
        %v519 = vadd.f32 0.0, %v518
        %520 = vmatmul.f32.gmra.mxu0 %v409
        %v521 = vpop.f32.mrf.mxu0
        %v522 = vadd.f32 0.0, %v521
        %523 = vmatmul.f32.gmra.mxu0 %v412
        %v524 = vpop.f32.mrf.mxu0
        %v525 = vadd.f32 0.0, %v524
        %526 = vmatmul.f32.gmra.mxu0 %v415
        %v527 = vpop.f32.mrf.mxu0
        %v528 = vadd.f32 0.0, %v527
        %529 = vmatmul.f32.gmra.mxu0 %v418
        %v530 = vpop.f32.mrf.mxu0
        %v531 = vadd.f32 0.0, %v530
        %532 = vmatmul.f32.gmra.mxu0 %v421
        %v533 = vpop.f32.mrf.mxu0
        %v534 = vadd.f32 0.0, %v533
        %535 = vmatmul.f32.gmra.mxu0 %v424
        %v536 = vpop.f32.mrf.mxu0
        %v537 = vadd.f32 0.0, %v536
        %538 = vmatmul.f32.gmra.mxu0 %v427
        %v539 = vpop.f32.mrf.mxu0
        %v540 = vadd.f32 0.0, %v539
        %541 = vmatmul.f32.gmra.mxu0 %v430
        %v542 = vpop.f32.mrf.mxu0
        %v543 = vadd.f32 0.0, %v542
        %544 = vmatmul.f32.gmra.mxu0 %v433
        %v545 = vpop.f32.mrf.mxu0
        %v546 = vadd.f32 0.0, %v545
        %547 = vmatmul.f32.gmra.mxu0 %v436
        %v548 = vpop.f32.mrf.mxu0
        %v549 = vadd.f32 0.0, %v548
        %550 = vmatmul.f32.gmra.mxu0 %v439
        %v551 = vpop.f32.mrf.mxu0
        %v552 = vadd.f32 0.0, %v551
        %553 = vmatmul.f32.gmra.mxu0 %v442
        %v554 = vpop.f32.mrf.mxu0
        %v555 = vadd.f32 0.0, %v554
        %556 = vmatmul.f32.gmra.mxu0 %v445
        %v557 = vpop.f32.mrf.mxu0
        %v558 = vadd.f32 0.0, %v557
        %559 = vmatmul.f32.gmra.mxu0 %v448
        %v560 = vpop.f32.mrf.mxu0
        %v561 = vadd.f32 0.0, %v560
        %562 = vmatmul.f32.gmra.mxu0 %v451
        %v563 = vpop.f32.mrf.mxu0
        %v564 = vadd.f32 0.0, %v563
        %565 = vmatmul.f32.gmra.mxu0 %v454
        %v566 = vpop.f32.mrf.mxu0
        %v567 = vadd.f32 0.0, %v566
        %568 = vmatmul.f32.gmra.mxu0 %v457
        %v569 = vpop.f32.mrf.mxu0
        %v570 = vadd.f32 0.0, %v569
        %571 = vmatmul.f32.gmra.mxu0 %v460
        %v572 = vpop.f32.mrf.mxu0
        %v573 = vadd.f32 0.0, %v572
        %574 = vmatmul.f32.gmra.mxu0 %v463
        %v575 = vpop.f32.mrf.mxu0
        %v576 = vadd.f32 0.0, %v575
        %577 = vmatmul.f32.gmra.mxu0 %v466
        %v578 = vpop.f32.mrf.mxu0
        %v579 = vadd.f32 0.0, %v578
        %580 = vmatmul.f32.gmra.mxu0 %v469
        %v581 = vpop.f32.mrf.mxu0
        %v582 = vadd.f32 0.0, %v581
        %583 = vmatmul.f32.gmra.mxu0 %v472
        %v584 = vpop.f32.mrf.mxu0
        %v585 = vadd.f32 0.0, %v584
        %586 = vmatmul.f32.gmra.mxu0 %v475
        %v587 = vpop.f32.mrf.mxu0
        %v588 = vadd.f32 0.0, %v587
        %589 = vmatmul.f32.gmra.mxu0 %v478
        %v590 = vpop.f32.mrf.mxu0
        %v591 = vadd.f32 0.0, %v590
        %592 = vmatmul.f32.gmra.mxu0 %v481
        %v593 = vpop.f32.mrf.mxu0
        %v594 = vadd.f32 0.0, %v593
        %595 = vmatmul.f32.gmra.mxu0 %v484
        %v596 = vpop.f32.mrf.mxu0
        %v597 = vadd.f32 0.0, %v596
        %598 = vmatmul.f32.gmra.mxu0 %v487
        %v599 = vpop.f32.mrf.mxu0
        %v600 = vadd.f32 0.0, %v599
        %601 = vmatmul.f32.gmra.mxu0 %v490
        %v602 = vpop.f32.mrf.mxu0
        %v603 = vadd.f32 0.0, %v602
        %604 = vmatmul.f32.gmra.mxu0 %v493
        %v605 = vpop.f32.mrf.mxu0
        %v606 = vadd.f32 0.0, %v605
        %607 = vmatmul.f32.gmra.mxu0 %v496
        %v608 = vpop.f32.mrf.mxu0
        %v609 = vadd.f32 0.0, %v608
        %610 = vdwg.mxu0
        %611 = vmatpush.msra.mxu0 0.0
        %612 = vmatpush.msra.mxu0 0.0
        %613 = vmatpush.msra.mxu0 0.0
        %614 = vmatpush.msra.mxu0 0.0
        %615 = vmatpush.msra.mxu0 0.0
        %616 = vmatpush.msra.mxu0 0.0
        %617 = vmatpush.msra.mxu0 0.0
        %618 = vmatpush.msra.mxu0 0.0
        %619 = vmatpush.msra.mxu0 0.0
        %620 = vmatpush.msra.mxu0 0.0
        %621 = vmatpush.msra.mxu0 0.0
        %622 = vmatpush.msra.mxu0 0.0
        %623 = vmatpush.msra.mxu0 0.0
        %624 = vmatpush.msra.mxu0 0.0
        %625 = vmatpush.msra.mxu0 0.0
        %626 = vmatpush.msra.mxu0 %v323
        %627 = vmatmul.f32.gmra.mxu0 %v403
        %v628 = vpop.f32.mrf.mxu0
        %v629 = vadd.f32 0.0, %v628
        %630 = vmatmul.f32.gmra.mxu0 %v406
        %v631 = vpop.f32.mrf.mxu0
        %v632 = vadd.f32 0.0, %v631
        %633 = vmatmul.f32.gmra.mxu0 %v409
        %v634 = vpop.f32.mrf.mxu0
        %v635 = vadd.f32 0.0, %v634
        %636 = vmatmul.f32.gmra.mxu0 %v412
        %v637 = vpop.f32.mrf.mxu0
        %v638 = vadd.f32 0.0, %v637
        %639 = vmatmul.f32.gmra.mxu0 %v415
        %v640 = vpop.f32.mrf.mxu0
        %v641 = vadd.f32 0.0, %v640
        %642 = vmatmul.f32.gmra.mxu0 %v418
        %v643 = vpop.f32.mrf.mxu0
        %v644 = vadd.f32 0.0, %v643
        %645 = vmatmul.f32.gmra.mxu0 %v421
        %v646 = vpop.f32.mrf.mxu0
        %v647 = vadd.f32 0.0, %v646
        %648 = vmatmul.f32.gmra.mxu0 %v424
        %v649 = vpop.f32.mrf.mxu0
        %v650 = vadd.f32 0.0, %v649
        %651 = vmatmul.f32.gmra.mxu0 %v427
        %v652 = vpop.f32.mrf.mxu0
        %v653 = vadd.f32 0.0, %v652
        %654 = vmatmul.f32.gmra.mxu0 %v430
        %v655 = vpop.f32.mrf.mxu0
        %v656 = vadd.f32 0.0, %v655
        %657 = vmatmul.f32.gmra.mxu0 %v433
        %v658 = vpop.f32.mrf.mxu0
        %v659 = vadd.f32 0.0, %v658
        %660 = vmatmul.f32.gmra.mxu0 %v436
        %v661 = vpop.f32.mrf.mxu0
        %v662 = vadd.f32 0.0, %v661
        %663 = vmatmul.f32.gmra.mxu0 %v439
        %v664 = vpop.f32.mrf.mxu0
        %v665 = vadd.f32 0.0, %v664
        %666 = vmatmul.f32.gmra.mxu0 %v442
        %v667 = vpop.f32.mrf.mxu0
        %v668 = vadd.f32 0.0, %v667
        %669 = vmatmul.f32.gmra.mxu0 %v445
        %v670 = vpop.f32.mrf.mxu0
        %v671 = vadd.f32 0.0, %v670
        %672 = vmatmul.f32.gmra.mxu0 %v448
        %v673 = vpop.f32.mrf.mxu0
        %v674 = vadd.f32 0.0, %v673
        %675 = vmatmul.f32.gmra.mxu0 %v451
        %v676 = vpop.f32.mrf.mxu0
        %v677 = vadd.f32 0.0, %v676
        %678 = vmatmul.f32.gmra.mxu0 %v454
        %v679 = vpop.f32.mrf.mxu0
        %v680 = vadd.f32 0.0, %v679
        %681 = vmatmul.f32.gmra.mxu0 %v457
        %v682 = vpop.f32.mrf.mxu0
        %v683 = vadd.f32 0.0, %v682
        %684 = vmatmul.f32.gmra.mxu0 %v460
        %v685 = vpop.f32.mrf.mxu0
        %v686 = vadd.f32 0.0, %v685
        %687 = vmatmul.f32.gmra.mxu0 %v463
        %v688 = vpop.f32.mrf.mxu0
        %v689 = vadd.f32 0.0, %v688
        %690 = vmatmul.f32.gmra.mxu0 %v466
        %v691 = vpop.f32.mrf.mxu0
        %v692 = vadd.f32 0.0, %v691
        %693 = vmatmul.f32.gmra.mxu0 %v469
        %v694 = vpop.f32.mrf.mxu0
        %v695 = vadd.f32 0.0, %v694
        %696 = vmatmul.f32.gmra.mxu0 %v472
        %v697 = vpop.f32.mrf.mxu0
        %v698 = vadd.f32 0.0, %v697
        %699 = vmatmul.f32.gmra.mxu0 %v475
        %v700 = vpop.f32.mrf.mxu0
        %v701 = vadd.f32 0.0, %v700
        %702 = vmatmul.f32.gmra.mxu0 %v478
        %v703 = vpop.f32.mrf.mxu0
        %v704 = vadd.f32 0.0, %v703
        %705 = vmatmul.f32.gmra.mxu0 %v481
        %v706 = vpop.f32.mrf.mxu0
        %v707 = vadd.f32 0.0, %v706
        %708 = vmatmul.f32.gmra.mxu0 %v484
        %v709 = vpop.f32.mrf.mxu0
        %v710 = vadd.f32 0.0, %v709
        %711 = vmatmul.f32.gmra.mxu0 %v487
        %v712 = vpop.f32.mrf.mxu0
        %v713 = vadd.f32 0.0, %v712
        %714 = vmatmul.f32.gmra.mxu0 %v490
        %v715 = vpop.f32.mrf.mxu0
        %v716 = vadd.f32 0.0, %v715
        %717 = vmatmul.f32.gmra.mxu0 %v493
        %v718 = vpop.f32.mrf.mxu0
        %v719 = vadd.f32 0.0, %v718
        %720 = vmatmul.f32.gmra.mxu0 %v496
        %v721 = vpop.f32.mrf.mxu0
        %v722 = vadd.f32 0.0, %v721
        %723 = vdwg.mxu0
        %v724 = vmax.f32 %v516, %v629
        %725 = vmax.xlane.f32.xlu0 %v724
        %v726 = vpop.xlane.xlu0 %725
        %v727 = vmax.f32 %v519, %v632
        %728 = vmax.xlane.f32.xlu0 %v727
        %v729 = vpop.xlane.xlu0 %728
        %v730 = vmax.f32 %v522, %v635
        %731 = vmax.xlane.f32.xlu0 %v730
        %v732 = vpop.xlane.xlu0 %731
        %v733 = vmax.f32 %v525, %v638
        %734 = vmax.xlane.f32.xlu0 %v733
        %v735 = vpop.xlane.xlu0 %734
        %v736 = vmax.f32 %v528, %v641
        %737 = vmax.xlane.f32.xlu0 %v736
        %v738 = vpop.xlane.xlu0 %737
        %v739 = vmax.f32 %v531, %v644
        %740 = vmax.xlane.f32.xlu0 %v739
        %v741 = vpop.xlane.xlu0 %740
        %v742 = vmax.f32 %v534, %v647
        %743 = vmax.xlane.f32.xlu0 %v742
        %v744 = vpop.xlane.xlu0 %743
        %v745 = vmax.f32 %v537, %v650
        %746 = vmax.xlane.f32.xlu0 %v745
        %v747 = vpop.xlane.xlu0 %746
        %v748 = vmax.f32 %v540, %v653
        %749 = vmax.xlane.f32.xlu0 %v748
        %v750 = vpop.xlane.xlu0 %749
        %v751 = vmax.f32 %v543, %v656
        %752 = vmax.xlane.f32.xlu0 %v751
        %v753 = vpop.xlane.xlu0 %752
        %v754 = vmax.f32 %v546, %v659
        %755 = vmax.xlane.f32.xlu0 %v754
        %v756 = vpop.xlane.xlu0 %755
        %v757 = vmax.f32 %v549, %v662
        %758 = vmax.xlane.f32.xlu0 %v757
        %v759 = vpop.xlane.xlu0 %758
        %v760 = vmax.f32 %v552, %v665
        %761 = vmax.xlane.f32.xlu0 %v760
        %v762 = vpop.xlane.xlu0 %761
        %v763 = vmax.f32 %v555, %v668
        %764 = vmax.xlane.f32.xlu0 %v763
        %v765 = vpop.xlane.xlu0 %764
        %v766 = vmax.f32 %v558, %v671
        %767 = vmax.xlane.f32.xlu0 %v766
        %v768 = vpop.xlane.xlu0 %767
        %v769 = vmax.f32 %v561, %v674
        %770 = vmax.xlane.f32.xlu0 %v769
        %v771 = vpop.xlane.xlu0 %770
        %v772 = vmax.f32 %v564, %v677
        %773 = vmax.xlane.f32.xlu0 %v772
        %v774 = vpop.xlane.xlu0 %773
        %v775 = vmax.f32 %v567, %v680
        %776 = vmax.xlane.f32.xlu0 %v775
        %v777 = vpop.xlane.xlu0 %776
        %v778 = vmax.f32 %v570, %v683
        %779 = vmax.xlane.f32.xlu0 %v778
        %v780 = vpop.xlane.xlu0 %779
        %v781 = vmax.f32 %v573, %v686
        %782 = vmax.xlane.f32.xlu0 %v781
        %v783 = vpop.xlane.xlu0 %782
        %v784 = vmax.f32 %v576, %v689
        %785 = vmax.xlane.f32.xlu0 %v784
        %v786 = vpop.xlane.xlu0 %785
        %v787 = vmax.f32 %v579, %v692
        %788 = vmax.xlane.f32.xlu0 %v787
        %v789 = vpop.xlane.xlu0 %788
        %v790 = vmax.f32 %v582, %v695
        %791 = vmax.xlane.f32.xlu0 %v790
        %v792 = vpop.xlane.xlu0 %791
        %v793 = vmax.f32 %v585, %v698
        %794 = vmax.xlane.f32.xlu0 %v793
        %v795 = vpop.xlane.xlu0 %794
        %v796 = vmax.f32 %v588, %v701
        %797 = vmax.xlane.f32.xlu0 %v796
        %v798 = vpop.xlane.xlu0 %797
        %v799 = vmax.f32 %v591, %v704
        %800 = vmax.xlane.f32.xlu0 %v799
        %v801 = vpop.xlane.xlu0 %800
        %v802 = vmax.f32 %v594, %v707
        %803 = vmax.xlane.f32.xlu0 %v802
        %v804 = vpop.xlane.xlu0 %803
        %v805 = vmax.f32 %v597, %v710
        %806 = vmax.xlane.f32.xlu0 %v805
        %v807 = vpop.xlane.xlu0 %806
        %v808 = vmax.f32 %v600, %v713
        %809 = vmax.xlane.f32.xlu0 %v808
        %v810 = vpop.xlane.xlu0 %809
        %v811 = vmax.f32 %v603, %v716
        %812 = vmax.xlane.f32.xlu0 %v811
        %v813 = vpop.xlane.xlu0 %812
        %v814 = vmax.f32 %v606, %v719
        %815 = vmax.xlane.f32.xlu0 %v814
        %v816 = vpop.xlane.xlu0 %815
        %v817 = vmax.f32 %v609, %v722
        %818 = vmax.xlane.f32.xlu0 %v817
        %v819 = vpop.xlane.xlu0 %818
        %v820 = vsub.f32 %v516, %v726
        %v821 = vsub.f32 %v629, %v726
        %v822 = vsub.f32 %v519, %v729
        %v823 = vsub.f32 %v632, %v729
        %v824 = vsub.f32 %v522, %v732
        %v825 = vsub.f32 %v635, %v732
        %v826 = vsub.f32 %v525, %v735
        %v827 = vsub.f32 %v638, %v735
        %v828 = vsub.f32 %v528, %v738
        %v829 = vsub.f32 %v641, %v738
        %v830 = vsub.f32 %v531, %v741
        %v831 = vsub.f32 %v644, %v741
        %v832 = vsub.f32 %v534, %v744
        %v833 = vsub.f32 %v647, %v744
        %v834 = vsub.f32 %v537, %v747
        %v835 = vsub.f32 %v650, %v747
        %v836 = vsub.f32 %v540, %v750
        %v837 = vsub.f32 %v653, %v750
        %v838 = vsub.f32 %v543, %v753
        %v839 = vsub.f32 %v656, %v753
        %v840 = vsub.f32 %v546, %v756
        %v841 = vsub.f32 %v659, %v756
        %v842 = vsub.f32 %v549, %v759
        %v843 = vsub.f32 %v662, %v759
        %v844 = vsub.f32 %v552, %v762
        %v845 = vsub.f32 %v665, %v762
        %v846 = vsub.f32 %v555, %v765
        %v847 = vsub.f32 %v668, %v765
        %v848 = vsub.f32 %v558, %v768
        %v849 = vsub.f32 %v671, %v768
        %v850 = vsub.f32 %v561, %v771
        %v851 = vsub.f32 %v674, %v771
        %v852 = vsub.f32 %v564, %v774
        %v853 = vsub.f32 %v677, %v774
        %v854 = vsub.f32 %v567, %v777
        %v855 = vsub.f32 %v680, %v777
        %v856 = vsub.f32 %v570, %v780
        %v857 = vsub.f32 %v683, %v780
        %v858 = vsub.f32 %v573, %v783
        %v859 = vsub.f32 %v686, %v783
        %v860 = vsub.f32 %v576, %v786
        %v861 = vsub.f32 %v689, %v786
        %v862 = vsub.f32 %v579, %v789
        %v863 = vsub.f32 %v692, %v789
        %v864 = vsub.f32 %v582, %v792
        %v865 = vsub.f32 %v695, %v792
        %v866 = vsub.f32 %v585, %v795
        %v867 = vsub.f32 %v698, %v795
        %v868 = vsub.f32 %v588, %v798
        %v869 = vsub.f32 %v701, %v798
        %v870 = vsub.f32 %v591, %v801
        %v871 = vsub.f32 %v704, %v801
        %v872 = vsub.f32 %v594, %v804
        %v873 = vsub.f32 %v707, %v804
        %v874 = vsub.f32 %v597, %v807
        %v875 = vsub.f32 %v710, %v807
        %v876 = vsub.f32 %v600, %v810
        %v877 = vsub.f32 %v713, %v810
        %v878 = vsub.f32 %v603, %v813
        %v879 = vsub.f32 %v716, %v813
        %v880 = vsub.f32 %v606, %v816
        %v881 = vsub.f32 %v719, %v816
        %v882 = vsub.f32 %v609, %v819
        %v883 = vsub.f32 %v722, %v819
        %v884 = vmul.f32 %v820, 1.442695
        %v885 = vpow.pop %v884
        %v886 = vmul.f32 %v821, 1.442695
        %v887 = vpow.pop %v886
        %v888 = vmul.f32 %v822, 1.442695
        %v889 = vpow.pop %v888
        %v890 = vmul.f32 %v823, 1.442695
        %v891 = vpow.pop %v890
        %v892 = vmul.f32 %v824, 1.442695
        %v893 = vpow.pop %v892
        %v894 = vmul.f32 %v825, 1.442695
        %v895 = vpow.pop %v894
        %v896 = vmul.f32 %v826, 1.442695
        %v897 = vpow.pop %v896
        %v898 = vmul.f32 %v827, 1.442695
        %v899 = vpow.pop %v898
        %v900 = vmul.f32 %v828, 1.442695
        %v901 = vpow.pop %v900
        %v902 = vmul.f32 %v829, 1.442695
        %v903 = vpow.pop %v902
        %v904 = vmul.f32 %v830, 1.442695
        %v905 = vpow.pop %v904
        %v906 = vmul.f32 %v831, 1.442695
        %v907 = vpow.pop %v906
        %v908 = vmul.f32 %v832, 1.442695
        %v909 = vpow.pop %v908
        %v910 = vmul.f32 %v833, 1.442695
        %v911 = vpow.pop %v910
        %v912 = vmul.f32 %v834, 1.442695
        %v913 = vpow.pop %v912
        %v914 = vmul.f32 %v835, 1.442695
        %v915 = vpow.pop %v914
        %v916 = vmul.f32 %v836, 1.442695
        %v917 = vpow.pop %v916
        %v918 = vmul.f32 %v837, 1.442695
        %v919 = vpow.pop %v918
        %v920 = vmul.f32 %v838, 1.442695
        %v921 = vpow.pop %v920
        %v922 = vmul.f32 %v839, 1.442695
        %v923 = vpow.pop %v922
        %v924 = vmul.f32 %v840, 1.442695
        %v925 = vpow.pop %v924
        %v926 = vmul.f32 %v841, 1.442695
        %v927 = vpow.pop %v926
        %v928 = vmul.f32 %v842, 1.442695
        %v929 = vpow.pop %v928
        %v930 = vmul.f32 %v843, 1.442695
        %v931 = vpow.pop %v930
        %v932 = vmul.f32 %v844, 1.442695
        %v933 = vpow.pop %v932
        %v934 = vmul.f32 %v845, 1.442695
        %v935 = vpow.pop %v934
        %v936 = vmul.f32 %v846, 1.442695
        %v937 = vpow.pop %v936
        %v938 = vmul.f32 %v847, 1.442695
        %v939 = vpow.pop %v938
        %v940 = vmul.f32 %v848, 1.442695
        %v941 = vpow.pop %v940
        %v942 = vmul.f32 %v849, 1.442695
        %v943 = vpow.pop %v942
        %v944 = vmul.f32 %v850, 1.442695
        %v945 = vpow.pop %v944
        %v946 = vmul.f32 %v851, 1.442695
        %v947 = vpow.pop %v946
        %v948 = vmul.f32 %v852, 1.442695
        %v949 = vpow.pop %v948
        %v950 = vmul.f32 %v853, 1.442695
        %v951 = vpow.pop %v950
        %v952 = vmul.f32 %v854, 1.442695
        %v953 = vpow.pop %v952
        %v954 = vmul.f32 %v855, 1.442695
        %v955 = vpow.pop %v954
        %v956 = vmul.f32 %v856, 1.442695
        %v957 = vpow.pop %v956
        %v958 = vmul.f32 %v857, 1.442695
        %v959 = vpow.pop %v958
        %v960 = vmul.f32 %v858, 1.442695
        %v961 = vpow.pop %v960
        %v962 = vmul.f32 %v859, 1.442695
        %v963 = vpow.pop %v962
        %v964 = vmul.f32 %v860, 1.442695
        %v965 = vpow.pop %v964
        %v966 = vmul.f32 %v861, 1.442695
        %v967 = vpow.pop %v966
        %v968 = vmul.f32 %v862, 1.442695
        %v969 = vpow.pop %v968
        %v970 = vmul.f32 %v863, 1.442695
        %v971 = vpow.pop %v970
        %v972 = vmul.f32 %v864, 1.442695
        %v973 = vpow.pop %v972
        %v974 = vmul.f32 %v865, 1.442695
        %v975 = vpow.pop %v974
        %v976 = vmul.f32 %v866, 1.442695
        %v977 = vpow.pop %v976
        %v978 = vmul.f32 %v867, 1.442695
        %v979 = vpow.pop %v978
        %v980 = vmul.f32 %v868, 1.442695
        %v981 = vpow.pop %v980
        %v982 = vmul.f32 %v869, 1.442695
        %v983 = vpow.pop %v982
        %v984 = vmul.f32 %v870, 1.442695
        %v985 = vpow.pop %v984
        %v986 = vmul.f32 %v871, 1.442695
        %v987 = vpow.pop %v986
        %v988 = vmul.f32 %v872, 1.442695
        %v989 = vpow.pop %v988
        %v990 = vmul.f32 %v873, 1.442695
        %v991 = vpow.pop %v990
        %v992 = vmul.f32 %v874, 1.442695
        %v993 = vpow.pop %v992
        %v994 = vmul.f32 %v875, 1.442695
        %v995 = vpow.pop %v994
        %v996 = vmul.f32 %v876, 1.442695
        %v997 = vpow.pop %v996
        %v998 = vmul.f32 %v877, 1.442695
        %v999 = vpow.pop %v998
        %v1000 = vmul.f32 %v878, 1.442695
        %v1001 = vpow.pop %v1000
        %v1002 = vmul.f32 %v879, 1.442695
        %v1003 = vpow.pop %v1002
        %v1004 = vmul.f32 %v880, 1.442695
        %v1005 = vpow.pop %v1004
        %v1006 = vmul.f32 %v881, 1.442695
        %v1007 = vpow.pop %v1006
        %v1008 = vmul.f32 %v882, 1.442695
        %v1009 = vpow.pop %v1008
        %v1010 = vmul.f32 %v883, 1.442695
        %v1011 = vpow.pop %v1010
        %1012 = vmatpush.xpose.msra.mxu0 %v945
        %1013 = vmatpush.xpose.msra.mxu0 %v941
        %1014 = vmatpush.xpose.msra.mxu0 %v937
        %1015 = vmatpush.xpose.msra.mxu0 %v933
        %1016 = vmatpush.xpose.msra.mxu0 %v929
        %1017 = vmatpush.xpose.msra.mxu0 %v925
        %1018 = vmatpush.xpose.msra.mxu0 %v921
        %1019 = vmatpush.xpose.msra.mxu0 %v917
        %1020 = vmatpush.xpose.msra.mxu0 %v913
        %1021 = vmatpush.xpose.msra.mxu0 %v909
        %1022 = vmatpush.xpose.msra.mxu0 %v905
        %1023 = vmatpush.xpose.msra.mxu0 %v901
        %1024 = vmatpush.xpose.msra.mxu0 %v897
        %1025 = vmatpush.xpose.msra.mxu0 %v893
        %1026 = vmatpush.xpose.msra.mxu0 %v889
        %1027 = vmatpush.xpose.msra.mxu0 %v885
        %1028 = vmatmul.f32.gmra.mxu0 %v291
        %v1029 = vpop.f32.mrf.mxu0
        %v1030 = vadd.f32 0.0, %v1029
        %1031 = vmatmul.f32.gmra.mxu0 %v294
        %v1032 = vpop.f32.mrf.mxu0
        %v1033 = vadd.f32 0.0, %v1032
        %1034 = vmatmul.f32.gmra.mxu0 %v297
        %v1035 = vpop.f32.mrf.mxu0
        %v1036 = vadd.f32 0.0, %v1035
        %1037 = vmatmul.f32.gmra.mxu0 %v300
        %v1038 = vpop.f32.mrf.mxu0
        %v1039 = vadd.f32 0.0, %v1038
        %1040 = vdwg.mxu0
        %1041 = vmatpush.xpose.msra.mxu0 %v947
        %1042 = vmatpush.xpose.msra.mxu0 %v943
        %1043 = vmatpush.xpose.msra.mxu0 %v939
        %1044 = vmatpush.xpose.msra.mxu0 %v935
        %1045 = vmatpush.xpose.msra.mxu0 %v931
        %1046 = vmatpush.xpose.msra.mxu0 %v927
        %1047 = vmatpush.xpose.msra.mxu0 %v923
        %1048 = vmatpush.xpose.msra.mxu0 %v919
        %1049 = vmatpush.xpose.msra.mxu0 %v915
        %1050 = vmatpush.xpose.msra.mxu0 %v911
        %1051 = vmatpush.xpose.msra.mxu0 %v907
        %1052 = vmatpush.xpose.msra.mxu0 %v903
        %1053 = vmatpush.xpose.msra.mxu0 %v899
        %1054 = vmatpush.xpose.msra.mxu0 %v895
        %1055 = vmatpush.xpose.msra.mxu0 %v891
        %1056 = vmatpush.xpose.msra.mxu0 %v887
        %1057 = vmatmul.f32.gmra.mxu0 %v326
        %v1058 = vpop.f32.mrf.mxu0
        %v1059 = vadd.f32 %v1030, %v1058
        %1060 = vmatmul.f32.gmra.mxu0 %v329
        %v1061 = vpop.f32.mrf.mxu0
        %v1062 = vadd.f32 %v1033, %v1061
        %1063 = vmatmul.f32.gmra.mxu0 %v332
        %v1064 = vpop.f32.mrf.mxu0
        %v1065 = vadd.f32 %v1036, %v1064
        %1066 = vmatmul.f32.gmra.mxu0 %v335
        %v1067 = vpop.f32.mrf.mxu0
        %v1068 = vadd.f32 %v1039, %v1067
        %1069 = vdwg.mxu0
        %1070 = vmatpush.xpose.msra.mxu0 %v1009
        %1071 = vmatpush.xpose.msra.mxu0 %v1005
        %1072 = vmatpush.xpose.msra.mxu0 %v1001
        %1073 = vmatpush.xpose.msra.mxu0 %v997
        %1074 = vmatpush.xpose.msra.mxu0 %v993
        %1075 = vmatpush.xpose.msra.mxu0 %v989
        %1076 = vmatpush.xpose.msra.mxu0 %v985
        %1077 = vmatpush.xpose.msra.mxu0 %v981
        %1078 = vmatpush.xpose.msra.mxu0 %v977
        %1079 = vmatpush.xpose.msra.mxu0 %v973
        %1080 = vmatpush.xpose.msra.mxu0 %v969
        %1081 = vmatpush.xpose.msra.mxu0 %v965
        %1082 = vmatpush.xpose.msra.mxu0 %v961
        %1083 = vmatpush.xpose.msra.mxu0 %v957
        %1084 = vmatpush.xpose.msra.mxu0 %v953
        %1085 = vmatpush.xpose.msra.mxu0 %v949
        %1086 = vmatmul.f32.gmra.mxu0 %v291
        %v1087 = vpop.f32.mrf.mxu0
        %v1088 = vadd.f32 0.0, %v1087
        %1089 = vmatmul.f32.gmra.mxu0 %v294
        %v1090 = vpop.f32.mrf.mxu0
        %v1091 = vadd.f32 0.0, %v1090
        %1092 = vmatmul.f32.gmra.mxu0 %v297
        %v1093 = vpop.f32.mrf.mxu0
        %v1094 = vadd.f32 0.0, %v1093
        %1095 = vmatmul.f32.gmra.mxu0 %v300
        %v1096 = vpop.f32.mrf.mxu0
        %v1097 = vadd.f32 0.0, %v1096
        %1098 = vdwg.mxu0
        %1099 = vmatpush.xpose.msra.mxu0 %v1011
        %1100 = vmatpush.xpose.msra.mxu0 %v1007
        %1101 = vmatpush.xpose.msra.mxu0 %v1003
        %1102 = vmatpush.xpose.msra.mxu0 %v999
        %1103 = vmatpush.xpose.msra.mxu0 %v995
        %1104 = vmatpush.xpose.msra.mxu0 %v991
        %1105 = vmatpush.xpose.msra.mxu0 %v987
        %1106 = vmatpush.xpose.msra.mxu0 %v983
        %1107 = vmatpush.xpose.msra.mxu0 %v979
        %1108 = vmatpush.xpose.msra.mxu0 %v975
        %1109 = vmatpush.xpose.msra.mxu0 %v971
        %1110 = vmatpush.xpose.msra.mxu0 %v967
        %1111 = vmatpush.xpose.msra.mxu0 %v963
        %1112 = vmatpush.xpose.msra.mxu0 %v959
        %1113 = vmatpush.xpose.msra.mxu0 %v955
        %1114 = vmatpush.xpose.msra.mxu0 %v951
        %1115 = vmatmul.f32.gmra.mxu0 %v326
        %v1116 = vpop.f32.mrf.mxu0
        %v1117 = vadd.f32 %v1088, %v1116
        %1118 = vmatmul.f32.gmra.mxu0 %v329
        %v1119 = vpop.f32.mrf.mxu0
        %v1120 = vadd.f32 %v1091, %v1119
        %1121 = vmatmul.f32.gmra.mxu0 %v332
        %v1122 = vpop.f32.mrf.mxu0
        %v1123 = vadd.f32 %v1094, %v1122
        %1124 = vmatmul.f32.gmra.mxu0 %v335
        %v1125 = vpop.f32.mrf.mxu0
        %v1126 = vadd.f32 %v1097, %v1125
        %1127 = vdwg.mxu0
        %1128 = vmatpush.xpose.msra.mxu0 %v945
        %1129 = vmatpush.xpose.msra.mxu0 %v941
        %1130 = vmatpush.xpose.msra.mxu0 %v937
        %1131 = vmatpush.xpose.msra.mxu0 %v933
        %1132 = vmatpush.xpose.msra.mxu0 %v929
        %1133 = vmatpush.xpose.msra.mxu0 %v925
        %1134 = vmatpush.xpose.msra.mxu0 %v921
        %1135 = vmatpush.xpose.msra.mxu0 %v917
        %1136 = vmatpush.xpose.msra.mxu0 %v913
        %1137 = vmatpush.xpose.msra.mxu0 %v909
        %1138 = vmatpush.xpose.msra.mxu0 %v905
        %1139 = vmatpush.xpose.msra.mxu0 %v901
        %1140 = vmatpush.xpose.msra.mxu0 %v897
        %1141 = vmatpush.xpose.msra.mxu0 %v893
        %1142 = vmatpush.xpose.msra.mxu0 %v889
        %1143 = vmatpush.xpose.msra.mxu0 %v885
        %1144 = vmatmul.f32.gmra.mxu0 1.0
        %v1145 = vpop.f32.mrf.mxu0
        %v1146 = vadd.f32 0.0, %v1145
        %1147 = vdwg.mxu0
        %1148 = vmatpush.xpose.msra.mxu0 %v947
        %1149 = vmatpush.xpose.msra.mxu0 %v943
        %1150 = vmatpush.xpose.msra.mxu0 %v939
        %1151 = vmatpush.xpose.msra.mxu0 %v935
        %1152 = vmatpush.xpose.msra.mxu0 %v931
        %1153 = vmatpush.xpose.msra.mxu0 %v927
        %1154 = vmatpush.xpose.msra.mxu0 %v923
        %1155 = vmatpush.xpose.msra.mxu0 %v919
        %1156 = vmatpush.xpose.msra.mxu0 %v915
        %1157 = vmatpush.xpose.msra.mxu0 %v911
        %1158 = vmatpush.xpose.msra.mxu0 %v907
        %1159 = vmatpush.xpose.msra.mxu0 %v903
        %1160 = vmatpush.xpose.msra.mxu0 %v899
        %1161 = vmatpush.xpose.msra.mxu0 %v895
        %1162 = vmatpush.xpose.msra.mxu0 %v891
        %1163 = vmatpush.xpose.msra.mxu0 %v887
        %1164 = vmatmul.f32.gmra.mxu0 1.0
        %v1165 = vpop.f32.mrf.mxu0
        %v1166 = vadd.f32 %v1146, %v1165
        %1167 = vdwg.mxu0
        %1168 = vmatpush.xpose.msra.mxu0 %v1009
        %1169 = vmatpush.xpose.msra.mxu0 %v1005
        %1170 = vmatpush.xpose.msra.mxu0 %v1001
        %1171 = vmatpush.xpose.msra.mxu0 %v997
        %1172 = vmatpush.xpose.msra.mxu0 %v993
        %1173 = vmatpush.xpose.msra.mxu0 %v989
        %1174 = vmatpush.xpose.msra.mxu0 %v985
        %1175 = vmatpush.xpose.msra.mxu0 %v981
        %1176 = vmatpush.xpose.msra.mxu0 %v977
        %1177 = vmatpush.xpose.msra.mxu0 %v973
        %1178 = vmatpush.xpose.msra.mxu0 %v969
        %1179 = vmatpush.xpose.msra.mxu0 %v965
        %1180 = vmatpush.xpose.msra.mxu0 %v961
        %1181 = vmatpush.xpose.msra.mxu0 %v957
        %1182 = vmatpush.xpose.msra.mxu0 %v953
        %1183 = vmatpush.xpose.msra.mxu0 %v949
        %1184 = vmatmul.f32.gmra.mxu0 1.0
        %v1185 = vpop.f32.mrf.mxu0
        %v1186 = vadd.f32 0.0, %v1185
        %1187 = vdwg.mxu0
        %1188 = vmatpush.xpose.msra.mxu0 %v1011
        %1189 = vmatpush.xpose.msra.mxu0 %v1007
        %1190 = vmatpush.xpose.msra.mxu0 %v1003
        %1191 = vmatpush.xpose.msra.mxu0 %v999
        %1192 = vmatpush.xpose.msra.mxu0 %v995
        %1193 = vmatpush.xpose.msra.mxu0 %v991
        %1194 = vmatpush.xpose.msra.mxu0 %v987
        %1195 = vmatpush.xpose.msra.mxu0 %v983
        %1196 = vmatpush.xpose.msra.mxu0 %v979
        %1197 = vmatpush.xpose.msra.mxu0 %v975
        %1198 = vmatpush.xpose.msra.mxu0 %v971
        %1199 = vmatpush.xpose.msra.mxu0 %v967
        %1200 = vmatpush.xpose.msra.mxu0 %v963
        %1201 = vmatpush.xpose.msra.mxu0 %v959
        %1202 = vmatpush.xpose.msra.mxu0 %v955
        %1203 = vmatpush.xpose.msra.mxu0 %v951
        %1204 = vmatmul.f32.gmra.mxu0 1.0
        %v1205 = vpop.f32.mrf.mxu0
        %v1206 = vadd.f32 %v1186, %v1205
        %1207 = vdwg.mxu0
        %v1208 = vrcp.pop %v1166
        %v1209 = vrcp.pop %v1206
        %v1210 = vperm.slane %v1208, 0
        %v1211 = vperm.slane %v1209, 0
        %v1212 = vmul.f32 %v1059, %v1210
        %v1213 = vmul.f32 %v1117, %v1211
        %v1214 = vmul.f32 %v1062, %v1210
        %v1215 = vmul.f32 %v1120, %v1211
        %v1216 = vmul.f32 %v1065, %v1210
        %v1217 = vmul.f32 %v1123, %v1211
        %v1218 = vmul.f32 %v1068, %v1210
        %v1219 = vmul.f32 %v1126, %v1211
        %v1220 = vstv %s197
        %v1221 = vmul.f32 %v1220, %v1212
        %v1222 = vmul.f32 %v1220, %v1213
        %v1223 = vmul.f32 %v1220, %v1214
        %v1224 = vmul.f32 %v1220, %v1215
        %v1225 = vmul.f32 %v1220, %v1216
        %v1226 = vmul.f32 %v1220, %v1217
        %v1227 = vmul.f32 %v1220, %v1218
        %v1228 = vmul.f32 %v1220, %v1219
        %v1229 = vadd.f32 %v1221, %v210
        %v1230 = vadd.f32 %v1222, %v211
        %v1231 = vadd.f32 %v1223, %v212
        %v1232 = vadd.f32 %v1224, %v213
        %v1233 = vadd.f32 %v1225, %v214
        %v1234 = vadd.f32 %v1226, %v215
        %v1235 = vadd.f32 %v1227, %v216
        %v1236 = vadd.f32 %v1228, %v217
        %1237 = vst [vmem:[%s191] sm:$0xff] %v1229
        %1238 = vst [vmem:[%s191 + $0x8] sm:$0xff] %v1230
        %1239 = vst [vmem:[%s191 + $0x10] sm:$0xff] %v1231
        %1240 = vst [vmem:[%s191 + $0x18] sm:$0xff] %v1232
        %1241 = vst [vmem:[%s191 + $0x20] sm:$0xff] %v1233
        %1242 = vst [vmem:[%s191 + $0x28] sm:$0xff] %v1234
        %1243 = vst [vmem:[%s191 + $0x30] sm:$0xff] %v1235
        %1244 = vst [vmem:[%s191 + $0x38] sm:$0xff] %v1236
        %s1245 = sand.u32 %s116, 1
        %s1246 = scalar_lea.sflag [#allocation4], %s1245
        %s1247 = sand.u32 %s116, 1
        %s1248 = smul.addr %s1247, 64
        %s1249 = scalar_lea.vmem [#allocation3], %s1248
        // Predicated region
        $region37: #{tpu_custom_call.1} parent=35 // pred_check
          %p1250 = pneg %p126
        $region38: #{tpu_custom_call.1} parent=35 // pred_check_branch
          %1252 = sbr.rel (%p1250) target = $region40
        $region39: #{tpu_custom_call.1} parent=35 // pred_region
          %1254 = vsyncadd %s1246, 0
          %s1255 = smul.addr %s19, 8
          %s1256 = smul.addr %s1255, 8
          %s1257 = scalar_lea.hbm %s4, %s1256
          %s1258 = sshll.u32 %s1249, 4
          %s1259 = int_to_ptr.vmem [resolvable:$true] %s1258
          %s1260 = sshll.u32 %s1257, 4
          %s1261 = int_to_ptr.hbm [resolvable:$true] %s1260
          %1266 = dma.vmem_to_hbm [thread:$0]  %s1259, 1024, %s1261, %s1246, 256, 256, 16
        $region40: #{tpu_custom_call.1} parent=35 // pred_fallthru
          _
      $region36: #{tpu_custom_call.1} parent=5 // pred_fallthru
        _
      %p1267 = scmp.le.s32.totalorder 2, %s14
      // Predicated region
      $region41: #{tpu_custom_call.1} parent=5 // pred_check
        %p1268 = pneg %p1267
      $region42: #{tpu_custom_call.1} parent=5 // pred_check_branch
        %1270 = sbr.rel (%p1268) target = $region44
      $region43: #{tpu_custom_call.1} parent=5 // pred_region
        %s1271 = ssub.s32 %s14, 2
        // Predicated region
        $region45: #{tpu_custom_call.1} parent=43 // pred_check
          %p1272 = pneg %p132
        $region46: #{tpu_custom_call.1} parent=43 // pred_check_branch
          %1274 = sbr.rel (%p1272) target = $region48
        $region47: #{tpu_custom_call.1} parent=43 // pred_region
          %s1275 = sand.u32 %s117, 1
          %s1276 = scalar_lea.sflag [#allocation4], %s1275
          %s1277 = sand.u32 %s117, 1
          %s1278 = smul.addr %s1277, 64
          %s1279 = scalar_lea.vmem [#allocation3], %s1278
          %1281 = dma.done %s1276, 1024
        $region48: #{tpu_custom_call.1} parent=43 // pred_fallthru
          _
      $region44: #{tpu_custom_call.1} parent=5 // pred_fallthru
        _
    $region6: #{tpu_custom_call.1} parent=1 // loop_footer
      %s18 = sadd.s32 1, %s14
    $region7: #{tpu_custom_call.1} parent=1 // loop_footer_branch
      %13 = sbr.rel target = $region3
    $region8: #{tpu_custom_call.1} parent=1 // loop_exit
      _
    %1282 = vsyncpa [#allocation4], 1
    %s1283 = scalar_lea.sflag [#allocation4], 1
    %1284 = vsyncpa %s1283, 1

</llo_original>
